<compile_context>
chip_gen: v7x
topology: tpu7x:2x2x1
jax: 0.10.0
libtpu: 0.0.40
codegen_flags: <defaults>
</compile_context>

<pallas_src>
import jax
import jax.numpy as jnp
from jax.experimental import pallas as pl
from jax.experimental.pallas import tpu as pltpu


# --------------------------------------------------------------------------
# Kernel
# --------------------------------------------------------------------------
def _mlp_kernel(x_ref,
                w1_ref, b1_ref,
                w2_ref, b2_ref,
                w3_ref, b3_ref,
                w4_ref, b4_ref,
                w5_ref, b5_ref,
                o_ref):
    """Fused 5-layer MLP + sigmoid on one (TB, F) batch tile, all in VMEM."""
    dt = w1_ref.dtype  # MXU operand dtype (f32 or bf16)

    x = x_ref[...]
    if x.dtype != dt:          # no-op when x already matches the weight dtype
        x = x.astype(dt)

    # Layers 1-4: MXU matmul with f32 accumulation; bias + ReLU on the VPU in
    # f32; cast back to the weight dtype only to feed the next MXU op.
    h = jnp.dot(x, w1_ref[...], preferred_element_type=jnp.float32)
    h = jnp.maximum(h + b1_ref[...].astype(jnp.float32), 0.0)
    for w_ref, b_ref in ((w2_ref, b2_ref), (w3_ref, b3_ref), (w4_ref, b4_ref)):
        h = jnp.dot(h.astype(dt), w_ref[...], preferred_element_type=jnp.float32)
        h = jnp.maximum(h + b_ref[...].astype(jnp.float32), 0.0)

    # Final (16 -> 1) layer, zero-padded to 128 lanes. Contract the lane axis
    # of h (TB, 128) against the padded weight row (1, 128) q@kT-style so the
    # result is produced directly in lane-dense (1, TB) form — no (TB,1)
    # column and no relayout before the store. MXU has plenty of slack here.
    w5 = w5_ref[...].astype(jnp.float32)                       # (1, 128)
    z = jnp.einsum('od,bd->ob', w5, h,
                   preferred_element_type=jnp.float32)          # (1, TB)
    z = z + b5_ref[...].astype(jnp.float32)                     # (1,1) bcast

    # Sigmoid: exp on the EUP, approximate reciprocal on the EUP.
    p = pl.reciprocal(1.0 + jnp.exp(-z), approx=True)
    o_ref[...] = p.astype(o_ref.dtype)                          # lane-dense vst


# --------------------------------------------------------------------------
# Wrapper
# --------------------------------------------------------------------------
def _round_up(n, m):
    return ((n + m - 1) // m) * m


def linear_classifier_outcome(x, packed_params, *, block_batch=512):
    """Run the fused MLP kernel.

    x: [B, F] (float32 or bfloat16). packed_params: output of pack_params().
    Returns [B, 1] float32 probabilities.
    """
    B, F = x.shape
    assert packed_params[0].shape[0] == F, "input_size mismatch"

    # Batch tile size: single full-extent tile for small batches, otherwise a
    # multiple of 128 (keeps the lane-dense output block a multiple of 128 and
    # the x block sublane-aligned). 512-2048 amortizes the ~0.35us/step cost.
    b8 = _round_up(B, 8)
    if b8 <= block_batch:
        tb = b8
    else:
        tb = max(128, (block_batch // 128) * 128)
    bp = _round_up(B, tb)
    num_tiles = bp // tb

    xp = x if bp == B else jnp.pad(x, ((0, bp - B), (0, 0)))

    # Weights/biases: full-extent blocks, constant index_map -> resident in
    # VMEM across grid steps (no re-DMA; ~60-130 KB total, cheap headroom).
    def const_spec(a):
        return pl.BlockSpec(a.shape, lambda i: (0, 0))

    flops = 2 * bp * (F * 128 + 3 * 128 * 128 + 128)
    bytes_accessed = int(xp.size * xp.dtype.itemsize
                         + sum(int(p.size * p.dtype.itemsize)
                               for p in packed_params)
                         + bp * 4)

    out = pl.pallas_call(
        _mlp_kernel,
        out_shape=jax.ShapeDtypeStruct((1, bp), jnp.float32),
        grid=(num_tiles,),
        in_specs=[pl.BlockSpec((tb, F), lambda i: (i, 0))]
                 + [const_spec(p) for p in packed_params],
        out_specs=pl.BlockSpec((1, tb), lambda i: (0, i)),
        compiler_params=pltpu.CompilerParams(
            dimension_semantics=("parallel",)),
        cost_estimate=pl.CostEstimate(flops=flops,
                                      transcendentals=2 * bp,
                                      bytes_accessed=bytes_accessed),
    )(xp, *packed_params)

    # Lane-dense (1, bp) -> (B, 1): wrapper-side glue, preserves row order.
    return out[0, :B].reshape(B, 1)


# --------------------------------------------------------------------------
# Parameters
# --------------------------------------------------------------------------
def init_params(key, input_size):
    """nn.Linear-style init: W ~ U(-1/sqrt(fan_in), ...), stored [in, out]."""
    dims = [input_size, 128, 64, 32, 16, 1]
    params = []
    for i in range(len(dims) - 1):
        fan_in, fan_out = dims[i], dims[i + 1]
        key, kw, kb = jax.random.split(key, 3)
        bound = 1.0 / jnp.sqrt(jnp.float32(fan_in))
        w = jax.random.uniform(kw, (fan_in, fan_out), jnp.float32, -bound, bound)
        b = jax.random.uniform(kb, (1, fan_out), jnp.float32, -bound, bound)
        params.append((w, b))
    return params


def pack_params(params, weight_dtype=jnp.float32):
    """Zero-pad hidden widths 64/32/16 up to 128 lanes and cast the matmul
    operands (weights) to `weight_dtype`; biases stay f32 (elementwise math is
    done in f32 in-kernel). Padding is exact: padded bias/weight columns are
    zero, ReLU(0)=0, and the padded rows of the next layer multiply those zero
    activations, so the forward pass is unchanged (up to dtype rounding)."""
    (w1, b1), (w2, b2), (w3, b3), (w4, b4), (w5, b5) = params

    def pad2(a, rows, cols):
        return jnp.zeros((rows, cols), a.dtype).at[:a.shape[0], :a.shape[1]].set(a)

    w1p, b1p = w1, b1                                   # (F,128), (1,128)
    w2p, b2p = pad2(w2, 128, 128), pad2(b2, 1, 128)
    w3p, b3p = pad2(w3, 128, 128), pad2(b3, 1, 128)
    w4p, b4p = pad2(w4, 128, 128), pad2(b4, 1, 128)
    w5p = pad2(w5.T, 1, 128)                            # row vector (1,128)
    b5p = b5                                            # (1,1)

    weights = [w1p, w2p, w3p, w4p, w5p]
    biases = [b1p, b2p, b3p, b4p, b5p]
    weights = [w.astype(weight_dtype) for w in weights]
    biases = [b.astype(jnp.float32) for b in biases]
    return [weights[0], biases[0], weights[1], biases[1], weights[2], biases[2],
            weights[3], biases[3], weights[4], biases[4]]


def reference_forward(x, params):
    """Pure-JAX reference of the original (unpadded) forward pass."""
    h = x
    for i, (w, b) in enumerate(params):
        h = h @ w + b
        if i < len(params) - 1:
            h = jnp.maximum(h, 0.0)
    return jax.nn.sigmoid(h)


# --------------------------------------------------------------------------
# Self-test
# --------------------------------------------------------------------------
if __name__ == "__main__":
    key = jax.random.PRNGKey(0)
    k_x, k_p, k_x2 = jax.random.split(key, 3)

    INPUT_SIZE = 32
    params = init_params(k_p, INPUT_SIZE)

    # 1) Small batch, f32 operands (single full-extent tile).
    x = jax.random.normal(k_x, (8, INPUT_SIZE), jnp.float32)
    out = jax.block_until_ready(
        linear_classifier_outcome(x, pack_params(params, jnp.float32)))
    ref = reference_forward(x, params)
    assert out.shape == (8, 1), out.shape
    assert jnp.allclose(out, ref, atol=2e-3), (
        f"f32 max abs err = {jnp.max(jnp.abs(out - ref))}")

    # 2) Multi-tile batch with padding (exercises the grid, the lane-dense
    #    output layout and the row-order mapping back to (B, 1)).
    x2 = jax.random.normal(k_x2, (300, INPUT_SIZE), jnp.float32)
    out2 = jax.block_until_ready(
        linear_classifier_outcome(x2, pack_params(params, jnp.float32),
                                  block_batch=128))
    ref2 = reference_forward(x2, params)
    assert out2.shape == (300, 1), out2.shape
    assert jnp.allclose(out2, ref2, atol=2e-3), (
        f"tiled max abs err = {jnp.max(jnp.abs(out2 - ref2))}")

    # 3) bf16 MXU operands (v6e/v7x path): bf16 x + bf16 weights, f32 accum.
    out3 = jax.block_until_ready(
        linear_classifier_outcome(x.astype(jnp.bfloat16),
                                  pack_params(params, jnp.bfloat16)))
    assert jnp.allclose(out3, ref, atol=5e-2), (
        f"bf16 max abs err = {jnp.max(jnp.abs(out3 - ref))}")

    print("KERNEL_OK")
</pallas_src>

<mosaic_0001>
module attributes {stable_mosaic.version = 11 : i64} {
  func.func @_mlp_kernel(%arg0: i32, %arg1: memref<8x32xf32, #tpu.memory_space<vmem>>, %arg2: memref<32x128xf32, #tpu.memory_space<vmem>>, %arg3: memref<1x128xf32, #tpu.memory_space<vmem>>, %arg4: memref<128x128xf32, #tpu.memory_space<vmem>>, %arg5: memref<1x128xf32, #tpu.memory_space<vmem>>, %arg6: memref<128x128xf32, #tpu.memory_space<vmem>>, %arg7: memref<1x128xf32, #tpu.memory_space<vmem>>, %arg8: memref<128x128xf32, #tpu.memory_space<vmem>>, %arg9: memref<1x128xf32, #tpu.memory_space<vmem>>, %arg10: memref<1x128xf32, #tpu.memory_space<vmem>>, %arg11: memref<1x1xf32, #tpu.memory_space<vmem>>, %arg12: memref<1x8xf32, #tpu.memory_space<vmem>>) attributes {dimension_semantics = [#tpu.dimension_semantics<parallel>], iteration_bounds = array<i64: 1>, scalar_prefetch = 0 : i64, scratch_operands = 0 : i64, tpu.core_type = #tpu.core_type<tc>, window_params = [{transform_indices = @transform_0, window_bounds = array<i64: 8, 32>}, {pipeline_mode = #tpu.pipeline_mode<synchronous>, transform_indices = @transform_1, window_bounds = array<i64: 32, 128>}, {pipeline_mode = #tpu.pipeline_mode<synchronous>, transform_indices = @transform_2, window_bounds = array<i64: 1, 128>}, {pipeline_mode = #tpu.pipeline_mode<synchronous>, transform_indices = @transform_3, window_bounds = array<i64: 128, 128>}, {pipeline_mode = #tpu.pipeline_mode<synchronous>, transform_indices = @transform_4, window_bounds = array<i64: 1, 128>}, {pipeline_mode = #tpu.pipeline_mode<synchronous>, transform_indices = @transform_5, window_bounds = array<i64: 128, 128>}, {pipeline_mode = #tpu.pipeline_mode<synchronous>, transform_indices = @transform_6, window_bounds = array<i64: 1, 128>}, {pipeline_mode = #tpu.pipeline_mode<synchronous>, transform_indices = @transform_7, window_bounds = array<i64: 128, 128>}, {pipeline_mode = #tpu.pipeline_mode<synchronous>, transform_indices = @transform_8, window_bounds = array<i64: 1, 128>}, {pipeline_mode = #tpu.pipeline_mode<synchronous>, transform_indices = @transform_9, window_bounds = array<i64: 1, 128>}, {pipeline_mode = #tpu.pipeline_mode<synchronous>, transform_indices = @transform_10, window_bounds = array<i64: 1, 1>}, {transform_indices = @transform_11, window_bounds = array<i64: 1, 8>}]} {
    %c0 = arith.constant 0 : index
    %c0_0 = arith.constant 0 : index
    %0 = vector.load %arg1[%c0, %c0_0] : memref<8x32xf32, #tpu.memory_space<vmem>>, vector<8x32xf32>
    %c0_1 = arith.constant 0 : index
    %c0_2 = arith.constant 0 : index
    %1 = vector.load %arg2[%c0_1, %c0_2] : memref<32x128xf32, #tpu.memory_space<vmem>>, vector<32x128xf32>
    %cst = arith.constant dense<0.000000e+00> : vector<8x128xf32>
    %2 = tpu.matmul %0, %1, %cst {dimension_numbers = #tpu.dot_dimension_numbers<[1], [0], [0], [1], [0, 0, 1, 1], [], []>} : vector<8x32xf32>, vector<32x128xf32>, vector<8x128xf32> -> vector<8x128xf32>
    %c0_3 = arith.constant 0 : index
    %c0_4 = arith.constant 0 : index
    %3 = vector.load %arg3[%c0_3, %c0_4] : memref<1x128xf32, #tpu.memory_space<vmem>>, vector<1x128xf32>
    %4 = vector.broadcast %3 : vector<1x128xf32> to vector<8x128xf32>
    %5 = arith.addf %2, %4 : vector<8x128xf32>
    %cst_5 = arith.constant 0.000000e+00 : f32
    %6 = vector.broadcast %cst_5 : f32 to vector<8x128xf32>
    %7 = arith.maximumf %5, %6 : vector<8x128xf32>
    %c0_6 = arith.constant 0 : index
    %c0_7 = arith.constant 0 : index
    %8 = vector.load %arg4[%c0_6, %c0_7] : memref<128x128xf32, #tpu.memory_space<vmem>>, vector<128x128xf32>
    %cst_8 = arith.constant dense<0.000000e+00> : vector<8x128xf32>
    %9 = tpu.matmul %7, %8, %cst_8 {dimension_numbers = #tpu.dot_dimension_numbers<[1], [0], [0], [1], [0, 0, 1, 1], [], []>} : vector<8x128xf32>, vector<128x128xf32>, vector<8x128xf32> -> vector<8x128xf32>
    %c0_9 = arith.constant 0 : index
    %c0_10 = arith.constant 0 : index
    %10 = vector.load %arg5[%c0_9, %c0_10] : memref<1x128xf32, #tpu.memory_space<vmem>>, vector<1x128xf32>
    %11 = vector.broadcast %10 : vector<1x128xf32> to vector<8x128xf32>
    %12 = arith.addf %9, %11 : vector<8x128xf32>
    %cst_11 = arith.constant 0.000000e+00 : f32
    %13 = vector.broadcast %cst_11 : f32 to vector<8x128xf32>
    %14 = arith.maximumf %12, %13 : vector<8x128xf32>
    %c0_12 = arith.constant 0 : index
    %c0_13 = arith.constant 0 : index
    %15 = vector.load %arg6[%c0_12, %c0_13] : memref<128x128xf32, #tpu.memory_space<vmem>>, vector<128x128xf32>
    %cst_14 = arith.constant dense<0.000000e+00> : vector<8x128xf32>
    %16 = tpu.matmul %14, %15, %cst_14 {dimension_numbers = #tpu.dot_dimension_numbers<[1], [0], [0], [1], [0, 0, 1, 1], [], []>} : vector<8x128xf32>, vector<128x128xf32>, vector<8x128xf32> -> vector<8x128xf32>
    %c0_15 = arith.constant 0 : index
    %c0_16 = arith.constant 0 : index
    %17 = vector.load %arg7[%c0_15, %c0_16] : memref<1x128xf32, #tpu.memory_space<vmem>>, vector<1x128xf32>
    %18 = vector.broadcast %17 : vector<1x128xf32> to vector<8x128xf32>
    %19 = arith.addf %16, %18 : vector<8x128xf32>
    %cst_17 = arith.constant 0.000000e+00 : f32
    %20 = vector.broadcast %cst_17 : f32 to vector<8x128xf32>
    %21 = arith.maximumf %19, %20 : vector<8x128xf32>
    %c0_18 = arith.constant 0 : index
    %c0_19 = arith.constant 0 : index
    %22 = vector.load %arg8[%c0_18, %c0_19] : memref<128x128xf32, #tpu.memory_space<vmem>>, vector<128x128xf32>
    %cst_20 = arith.constant dense<0.000000e+00> : vector<8x128xf32>
    %23 = tpu.matmul %21, %22, %cst_20 {dimension_numbers = #tpu.dot_dimension_numbers<[1], [0], [0], [1], [0, 0, 1, 1], [], []>} : vector<8x128xf32>, vector<128x128xf32>, vector<8x128xf32> -> vector<8x128xf32>
    %c0_21 = arith.constant 0 : index
    %c0_22 = arith.constant 0 : index
    %24 = vector.load %arg9[%c0_21, %c0_22] : memref<1x128xf32, #tpu.memory_space<vmem>>, vector<1x128xf32>
    %25 = vector.broadcast %24 : vector<1x128xf32> to vector<8x128xf32>
    %26 = arith.addf %23, %25 : vector<8x128xf32>
    %cst_23 = arith.constant 0.000000e+00 : f32
    %27 = vector.broadcast %cst_23 : f32 to vector<8x128xf32>
    %28 = arith.maximumf %26, %27 : vector<8x128xf32>
    %c0_24 = arith.constant 0 : index
    %c0_25 = arith.constant 0 : index
    %29 = vector.load %arg10[%c0_24, %c0_25] : memref<1x128xf32, #tpu.memory_space<vmem>>, vector<1x128xf32>
    "tpu.trace_start"() <{level = 10 : i32, message = "od,bd->ob"}> : () -> ()
    %cst_26 = arith.constant dense<0.000000e+00> : vector<1x8xf32>
    %30 = tpu.matmul %29, %28, %cst_26 {dimension_numbers = #tpu.dot_dimension_numbers<[1], [1], [0], [0], [0, 0, 1, 0], [], []>} : vector<1x128xf32>, vector<8x128xf32>, vector<1x8xf32> -> vector<1x8xf32>
    "tpu.trace_stop"() : () -> ()
    %c0_27 = arith.constant 0 : index
    %c0_28 = arith.constant 0 : index
    %31 = vector.load %arg11[%c0_27, %c0_28] : memref<1x1xf32, #tpu.memory_space<vmem>>, vector<1x1xf32>
    %32 = vector.broadcast %31 : vector<1x1xf32> to vector<1x8xf32>
    %33 = arith.addf %30, %32 : vector<1x8xf32>
    %cst_29 = arith.constant 0.000000e+00 : f32
    %34 = vector.broadcast %cst_29 : f32 to vector<1x8xf32>
    %35 = arith.subf %34, %33 : vector<1x8xf32>
    %36 = math.exp %35 : vector<1x8xf32>
    %cst_30 = arith.constant 1.000000e+00 : f32
    %37 = vector.broadcast %cst_30 : f32 to vector<1x8xf32>
    %38 = arith.addf %37, %36 : vector<1x8xf32>
    %39 = tpu.reciprocal %38 {approx = true} : vector<1x8xf32> -> vector<1x8xf32>
    %c0_31 = arith.constant 0 : index
    %c0_32 = arith.constant 0 : index
    %40 = vector.load %arg12[%c0_31, %c0_32] : memref<1x8xf32, #tpu.memory_space<vmem>>, vector<1x8xf32>
    tpu.vector_store %arg12[%c0_31, %c0_32], %39 {strides = array<i32>} : memref<1x8xf32, #tpu.memory_space<vmem>>, vector<1x8xf32>,
    return
  }
  func.func @transform_0(%arg0: i32) -> (i32, i32) {
    %c0_i32 = arith.constant 0 : i32
    %c0_i32_0 = arith.constant 0 : i32
    return %arg0, %c0_i32 : i32, i32
  }
  func.func @transform_1(%arg0: i32) -> (i32, i32) {
    %c0_i32 = arith.constant 0 : i32
    %c0_i32_0 = arith.constant 0 : i32
    %c0_i32_1 = arith.constant 0 : i32
    return %c0_i32, %c0_i32_0 : i32, i32
  }
  func.func @transform_2(%arg0: i32) -> (i32, i32) {
    %c0_i32 = arith.constant 0 : i32
    %c0_i32_0 = arith.constant 0 : i32
    %c0_i32_1 = arith.constant 0 : i32
    return %c0_i32, %c0_i32_0 : i32, i32
  }
  func.func @transform_3(%arg0: i32) -> (i32, i32) {
    %c0_i32 = arith.constant 0 : i32
    %c0_i32_0 = arith.constant 0 : i32
    %c0_i32_1 = arith.constant 0 : i32
    return %c0_i32, %c0_i32_0 : i32, i32
  }
  func.func @transform_4(%arg0: i32) -> (i32, i32) {
    %c0_i32 = arith.constant 0 : i32
    %c0_i32_0 = arith.constant 0 : i32
    %c0_i32_1 = arith.constant 0 : i32
    return %c0_i32, %c0_i32_0 : i32, i32
  }
  func.func @transform_5(%arg0: i32) -> (i32, i32) {
    %c0_i32 = arith.constant 0 : i32
    %c0_i32_0 = arith.constant 0 : i32
    %c0_i32_1 = arith.constant 0 : i32
    return %c0_i32, %c0_i32_0 : i32, i32
  }
  func.func @transform_6(%arg0: i32) -> (i32, i32) {
    %c0_i32 = arith.constant 0 : i32
    %c0_i32_0 = arith.constant 0 : i32
    %c0_i32_1 = arith.constant 0 : i32
    return %c0_i32, %c0_i32_0 : i32, i32
  }
  func.func @transform_7(%arg0: i32) -> (i32, i32) {
    %c0_i32 = arith.constant 0 : i32
    %c0_i32_0 = arith.constant 0 : i32
    %c0_i32_1 = arith.constant 0 : i32
    return %c0_i32, %c0_i32_0 : i32, i32
  }
  func.func @transform_8(%arg0: i32) -> (i32, i32) {
    %c0_i32 = arith.constant 0 : i32
    %c0_i32_0 = arith.constant 0 : i32
    %c0_i32_1 = arith.constant 0 : i32
    return %c0_i32, %c0_i32_0 : i32, i32
  }
  func.func @transform_9(%arg0: i32) -> (i32, i32) {
    %c0_i32 = arith.constant 0 : i32
    %c0_i32_0 = arith.constant 0 : i32
    %c0_i32_1 = arith.constant 0 : i32
    return %c0_i32, %c0_i32_0 : i32, i32
  }
  func.func @transform_10(%arg0: i32) -> (i32, i32) {
    %c0_i32 = arith.constant 0 : i32
    %c0_i32_0 = arith.constant 0 : i32
    %c0_i32_1 = arith.constant 0 : i32
    return %c0_i32, %c0_i32_0 : i32, i32
  }
  func.func @transform_11(%arg0: i32) -> (i32, i32) {
    %c0_i32 = arith.constant 0 : i32
    %c0_i32_0 = arith.constant 0 : i32
    return %c0_i32, %arg0 : i32, i32
  }
}

</mosaic_0001>

<llo_original>
// kernel: tpu_custom_call.1
$region0: #{tpu_custom_call.1}
  #allocation0 [shape = 'u32[]', space=smem, size = 0x4, offset = 0x4, fixed_abs, tag = 'smem constant byte address 0x4 - core index']
  #allocation1 [shape = 'u32[144,128]{1,0:T(1,128)}', space=vmem, size = 0x12000, scoped, tag = 'internal scratch']
  #allocation2 [shape = 'f32[1,1]{1,0:T(1,128)S(1)}', space=vmem, size = 0x200, scoped, tag = 'scoped memory for tpu_custom_call.1']
  %s0 = inlined_call_operand.hbm [shape: f32[8,32], index: 0, kind: input, shape index: {}]
  %s1 = inlined_call_operand.hbm [shape: f32[32,128], index: 1, kind: input, shape index: {}]
  %s2 = inlined_call_operand.vmem [shape: f32[1,128], index: 2, kind: input, shape index: {}]
  %s3 = inlined_call_operand.hbm [shape: f32[128,128], index: 3, kind: input, shape index: {}]
  %s4 = inlined_call_operand.vmem [shape: f32[1,128], index: 4, kind: input, shape index: {}]
  %s5 = inlined_call_operand.hbm [shape: f32[128,128], index: 5, kind: input, shape index: {}]
  %s6 = inlined_call_operand.vmem [shape: f32[1,128], index: 6, kind: input, shape index: {}]
  %s7 = inlined_call_operand.hbm [shape: f32[128,128], index: 7, kind: input, shape index: {}]
  %s8 = inlined_call_operand.vmem [shape: f32[1,128], index: 8, kind: input, shape index: {}]
  %s9 = inlined_call_operand.vmem [shape: f32[1,128], index: 9, kind: input, shape index: {}]
  %s10 = inlined_call_operand.<no memory space> [shape: f32[1,1], index: 10, kind: input, shape index: {}]
  %s11 = inlined_call_operand.hbm [shape: f32[1,8], index: 11, kind: output, shape index: {}]
  %s12 = sld [smem:[#allocation0]]
  $region74: #{tpu_custom_call.1} parent=0
    _
  %s14 = ssub.s32 1, %s12
  %s15 = scalar_select 0, %s14, %s12
  %v16 = vstv %s10
  %17 = vst [vmem:[#allocation2] sm:$0x1] %v16
  $region1: #{tpu_custom_call.1} parent=0
    #allocation3 [shape = 'u8[4096]{0}', space=vmem, size = 0x1000, scoped, tag = 'input window, operand 0, single buffered']
    #allocation4 [shape = 's32[1]{0}', space=sflag, size = 0x4, scoped, tag = 'scoped memory for tpu_custom_call.1']
    #allocation5 [shape = 's32[1]{0}', space=sflag, size = 0x4, scoped, tag = 'scoped memory for tpu_custom_call.1']
    #allocation6 [shape = 'u8[16384]{0}', space=vmem, size = 0x4000, scoped, tag = 'input window, operand 1, single buffered']
    #allocation7 [shape = 's32[1]{0}', space=sflag, size = 0x4, scoped, tag = 'scoped memory for tpu_custom_call.1']
    #allocation8 [shape = 'u8[65536]{0}', space=vmem, size = 0x10000, scoped, tag = 'input window, operand 3, single buffered']
    #allocation9 [shape = 'u8[65536]{0}', space=vmem, size = 0x10000, scoped, tag = 'input window, operand 5, single buffered']
    #allocation10 [shape = 's32[1]{0}', space=sflag, size = 0x4, scoped, tag = 'scoped memory for tpu_custom_call.1']
    #allocation11 [shape = 'u8[65536]{0}', space=vmem, size = 0x10000, scoped, tag = 'input window, operand 7, single buffered']
    #allocation12 [shape = 'u8[512]{0}', space=vmem, size = 0x400, scoped, tag = 'output window, operand 0, single buffered']
    %18 = vsyncpa [#allocation4], 0
    %19 = vsyncpa [#allocation7], 0
    %20 = vsyncpa [#allocation10], 0
    %21 = vsyncpa [#allocation5], 0
    // Predicated region
    $region2: #{tpu_custom_call.1} parent=1 // pred_check
      _
    $region3: #{tpu_custom_call.1} parent=1 // pred_check_branch
      %23 = sbr.rel (0) target = $region5
    $region4: #{tpu_custom_call.1} parent=1 // pred_region
      %s25 = ssub.s32 128, 128
      %26 = vsyncadd [#allocation4], %s25
      %s28 = sshll.u32 [#allocation3], 4
      %s29 = int_to_ptr.vmem [resolvable:$true] %s28
      %31 = dma.hbm_to_vmem [thread:$0]  %s0, 128, %s29, [#allocation4]
    $region5: #{tpu_custom_call.1} parent=1 // pred_fallthru
      _
    // Predicated region
    $region6: #{tpu_custom_call.1} parent=1 // pred_check
      _
    $region7: #{tpu_custom_call.1} parent=1 // pred_check_branch
      %33 = sbr.rel (0) target = $region9
    $region8: #{tpu_custom_call.1} parent=1 // pred_region
      %s35 = ssub.s32 512, 512
      %36 = vsyncadd [#allocation7], %s35
      %s37 = sshll.u32 [#allocation6], 4
      %s38 = int_to_ptr.vmem [resolvable:$true] %s37
      %43 = dma.hbm_to_vmem [thread:$0]  %s1, 512, %s38, [#allocation7], 128, 128, 8
    $region9: #{tpu_custom_call.1} parent=1 // pred_fallthru
      _
    // Predicated region
    $region10: #{tpu_custom_call.1} parent=1 // pred_check
      _
    $region11: #{tpu_custom_call.1} parent=1 // pred_check_branch
      %45 = sbr.rel (0) target = $region13
    $region12: #{tpu_custom_call.1} parent=1 // pred_region
      _
    $region13: #{tpu_custom_call.1} parent=1 // pred_fallthru
      _
    // Predicated region
    $region14: #{tpu_custom_call.1} parent=1 // pred_check
      _
    $region15: #{tpu_custom_call.1} parent=1 // pred_check_branch
      %47 = sbr.rel (0) target = $region17
    $region16: #{tpu_custom_call.1} parent=1 // pred_region
      %s49 = ssub.s32 2048, 2048
      %50 = vsyncadd [#allocation7], %s49
      %s51 = sshll.u32 [#allocation8], 4
      %s52 = int_to_ptr.vmem [resolvable:$true] %s51
      %57 = dma.hbm_to_vmem [thread:$0]  %s3, 2048, %s52, [#allocation7], 128, 128, 8
    $region17: #{tpu_custom_call.1} parent=1 // pred_fallthru
      _
    // Predicated region
    $region18: #{tpu_custom_call.1} parent=1 // pred_check
      _
    $region19: #{tpu_custom_call.1} parent=1 // pred_check_branch
      %59 = sbr.rel (0) target = $region21
    $region20: #{tpu_custom_call.1} parent=1 // pred_region
      _
    $region21: #{tpu_custom_call.1} parent=1 // pred_fallthru
      _
    // Predicated region
    $region22: #{tpu_custom_call.1} parent=1 // pred_check
      _
    $region23: #{tpu_custom_call.1} parent=1 // pred_check_branch
      %61 = sbr.rel (0) target = $region25
    $region24: #{tpu_custom_call.1} parent=1 // pred_region
      %s63 = ssub.s32 2048, 2048
      %64 = vsyncadd [#allocation10], %s63
      %s65 = sshll.u32 [#allocation9], 4
      %s66 = int_to_ptr.vmem [resolvable:$true] %s65
      %71 = dma.hbm_to_vmem [thread:$0]  %s5, 2048, %s66, [#allocation10], 128, 128, 8
    $region25: #{tpu_custom_call.1} parent=1 // pred_fallthru
      _
    // Predicated region
    $region26: #{tpu_custom_call.1} parent=1 // pred_check
      _
    $region27: #{tpu_custom_call.1} parent=1 // pred_check_branch
      %73 = sbr.rel (0) target = $region29
    $region28: #{tpu_custom_call.1} parent=1 // pred_region
      _
    $region29: #{tpu_custom_call.1} parent=1 // pred_fallthru
      _
    // Predicated region
    $region30: #{tpu_custom_call.1} parent=1 // pred_check
      _
    $region31: #{tpu_custom_call.1} parent=1 // pred_check_branch
      %75 = sbr.rel (0) target = $region33
    $region32: #{tpu_custom_call.1} parent=1 // pred_region
      %s77 = ssub.s32 2048, 2048
      %78 = vsyncadd [#allocation10], %s77
      %s79 = sshll.u32 [#allocation11], 4
      %s80 = int_to_ptr.vmem [resolvable:$true] %s79
      %85 = dma.hbm_to_vmem [thread:$0]  %s7, 2048, %s80, [#allocation10], 128, 128, 8
    $region33: #{tpu_custom_call.1} parent=1 // pred_fallthru
      _
    // Predicated region
    $region34: #{tpu_custom_call.1} parent=1 // pred_check
      _
    $region35: #{tpu_custom_call.1} parent=1 // pred_check_branch
      %87 = sbr.rel (0) target = $region37
    $region36: #{tpu_custom_call.1} parent=1 // pred_region
      _
    $region37: #{tpu_custom_call.1} parent=1 // pred_fallthru
      _
    // Predicated region
    $region38: #{tpu_custom_call.1} parent=1 // pred_check
      _
    $region39: #{tpu_custom_call.1} parent=1 // pred_check_branch
      %89 = sbr.rel (0) target = $region41
    $region40: #{tpu_custom_call.1} parent=1 // pred_region
      _
    $region41: #{tpu_custom_call.1} parent=1 // pred_fallthru
      _
    // Predicated region
    $region42: #{tpu_custom_call.1} parent=1 // pred_check
      _
    $region43: #{tpu_custom_call.1} parent=1 // pred_check_branch
      %91 = sbr.rel (0) target = $region45
    $region44: #{tpu_custom_call.1} parent=1 // pred_region
      _
    $region45: #{tpu_custom_call.1} parent=1 // pred_fallthru
      _
    // Predicated region
    $region46: #{tpu_custom_call.1} parent=1 // pred_check
      _
    $region47: #{tpu_custom_call.1} parent=1 // pred_check_branch
      %93 = sbr.rel (0) target = $region49
    $region48: #{tpu_custom_call.1} parent=1 // pred_region
      %94 = dma.done [#allocation4], 128
    $region49: #{tpu_custom_call.1} parent=1 // pred_fallthru
      _
    // Predicated region
    $region50: #{tpu_custom_call.1} parent=1 // pred_check
      _
    $region51: #{tpu_custom_call.1} parent=1 // pred_check_branch
      %96 = sbr.rel (0) target = $region53
    $region52: #{tpu_custom_call.1} parent=1 // pred_region
      %97 = dma.done [#allocation7], 512
    $region53: #{tpu_custom_call.1} parent=1 // pred_fallthru
      _
    // Predicated region
    $region54: #{tpu_custom_call.1} parent=1 // pred_check
      _
    $region55: #{tpu_custom_call.1} parent=1 // pred_check_branch
      %99 = sbr.rel (0) target = $region57
    $region56: #{tpu_custom_call.1} parent=1 // pred_region
      %100 = dma.done [#allocation7], 2048
    $region57: #{tpu_custom_call.1} parent=1 // pred_fallthru
      _
    // Predicated region
    $region58: #{tpu_custom_call.1} parent=1 // pred_check
      _
    $region59: #{tpu_custom_call.1} parent=1 // pred_check_branch
      %102 = sbr.rel (0) target = $region61
    $region60: #{tpu_custom_call.1} parent=1 // pred_region
      %103 = dma.done [#allocation10], 2048
    $region61: #{tpu_custom_call.1} parent=1 // pred_fallthru
      _
    // Predicated region
    $region62: #{tpu_custom_call.1} parent=1 // pred_check
      _
    $region63: #{tpu_custom_call.1} parent=1 // pred_check_branch
      %105 = sbr.rel (0) target = $region65
    $region64: #{tpu_custom_call.1} parent=1 // pred_region
      %106 = dma.done [#allocation10], 2048
    $region65: #{tpu_custom_call.1} parent=1 // pred_fallthru
      _
    %v107 = vld [vmem:[#allocation3] sm:$0xff]
    %v108 = vld [vmem:[#allocation6] sm:$0xff]
    %v109 = vld [vmem:[#allocation6 + $0x8] sm:$0xff]
    %v110 = vld [vmem:[#allocation6 + $0x10] sm:$0xff]
    %v111 = vld [vmem:[#allocation6 + $0x18] sm:$0xff]
    %v112 = vld [vmem:[%s2] sm:$0x1]
    %v114 = vlaneseq
    %v115 = vshrl.u32 %v114, 7
    %v116 = vsub.s32 0, %v115
    %v117 = vrot.slane %v112, %v116
    %vm119 = vcmask 261120
    %v121 = vsel %vm119, %v107, 0
    %123 = vmatprep.subr.mxu0 0.0
    %124 = vmatpush1.msra.mxu0 %v108
    %125 = vmatprep.subr.mxu0 0.0
    %126 = vmatpush1.msra.mxu0 %v109
    %127 = vmatprep.subr.mxu0 0.0
    %128 = vmatpush1.msra.mxu0 %v110
    %129 = vmatprep.subr.mxu0 0.0
    %130 = vmatpush1.msra.mxu0 %v111
    %131 = vmatprep.subr.mxu0 0.0
    %132 = vmatpush1.msra.mxu0 0.0
    %133 = vmatprep.subr.mxu0 0.0
    %134 = vmatpush1.msra.mxu0 0.0
    %135 = vmatprep.subr.mxu0 0.0
    %136 = vmatpush1.msra.mxu0 0.0
    %137 = vmatprep.subr.mxu0 0.0
    %138 = vmatpush1.msra.mxu0 0.0
    %139 = vmatprep.subr.mxu0 0.0
    %140 = vmatpush1.msra.mxu0 0.0
    %141 = vmatprep.subr.mxu0 0.0
    %142 = vmatpush1.msra.mxu0 0.0
    %143 = vmatprep.subr.mxu0 0.0
    %144 = vmatpush1.msra.mxu0 0.0
    %145 = vmatprep.subr.mxu0 0.0
    %146 = vmatpush1.msra.mxu0 0.0
    %147 = vmatprep.subr.mxu0 0.0
    %148 = vmatpush1.msra.mxu0 0.0
    %149 = vmatprep.subr.mxu0 0.0
    %150 = vmatpush1.msra.mxu0 0.0
    %151 = vmatprep.subr.mxu0 0.0
    %152 = vmatpush1.msra.mxu0 0.0
    %153 = vmatprep.subr.mxu0 0.0
    %154 = vmatpush1.msra.mxu0 0.0
    %155 = vmatprep.subr.mxu0 0.0
    %156 = vmatpush1.msra.mxu0 0.0
    %157 = vmatprep.subr.mxu0 0.0
    %158 = vmatpush1.msra.mxu0 0.0
    %159 = vmatprep.subr.mxu0 0.0
    %160 = vmatpush1.msra.mxu0 0.0
    %161 = vmatprep.subr.mxu0 0.0
    %162 = vmatpush1.msra.mxu0 0.0
    %163 = vmatprep.subr.mxu0 0.0
    %164 = vmatpush1.msra.mxu0 0.0
    %165 = vmatprep.subr.mxu0 0.0
    %166 = vmatpush1.msra.mxu0 0.0
    %167 = vmatprep.subr.mxu0 0.0
    %168 = vmatpush1.msra.mxu0 0.0
    %169 = vmatprep.subr.mxu0 0.0
    %170 = vmatpush1.msra.mxu0 0.0
    %171 = vmatprep.subr.mxu0 0.0
    %172 = vmatpush1.msra.mxu0 0.0
    %173 = vmatprep.subr.mxu0 0.0
    %174 = vmatpush1.msra.mxu0 0.0
    %175 = vmatprep.subr.mxu0 0.0
    %176 = vmatpush1.msra.mxu0 0.0
    %177 = vmatprep.subr.mxu0 0.0
    %178 = vmatpush1.msra.mxu0 0.0
    %179 = vmatprep.subr.mxu0 0.0
    %180 = vmatpush1.msra.mxu0 0.0
    %181 = vmatprep.subr.mxu0 0.0
    %182 = vmatpush1.msra.mxu0 0.0
    %183 = vmatprep.subr.mxu0 0.0
    %184 = vmatpush1.msra.mxu0 0.0
    %185 = vmatprep.subr.mxu0 0.0
    %186 = vmatpush1.msra.mxu0 0.0
    %187 = vmatprep.mubr.f32.mxu0 0.0
    %188 = vmatmul.mubr.f32.gmra.mrb[0].mxu0 %v121
    %v189 = vpop.f32.mrb[0].mxu0
    %v190 = vadd.f32 %v117, %v189
    %v191 = vpop.f32.mrb[0].mxu0
    %192 = vdwg.mxu0
    %v193 = vmax.f32 %v190, 0.0
    %v194 = vld [vmem:[#allocation8] sm:$0xff]
    %v195 = vld [vmem:[#allocation8 + $0x8] sm:$0xff]
    %v196 = vld [vmem:[#allocation8 + $0x10] sm:$0xff]
    %v197 = vld [vmem:[#allocation8 + $0x18] sm:$0xff]
    %v198 = vld [vmem:[#allocation8 + $0x20] sm:$0xff]
    %v199 = vld [vmem:[#allocation8 + $0x28] sm:$0xff]
    %v200 = vld [vmem:[#allocation8 + $0x30] sm:$0xff]
    %v201 = vld [vmem:[#allocation8 + $0x38] sm:$0xff]
    %v202 = vld [vmem:[#allocation8 + $0x40] sm:$0xff]
    %v203 = vld [vmem:[#allocation8 + $0x48] sm:$0xff]
    %v204 = vld [vmem:[#allocation8 + $0x50] sm:$0xff]
    %v205 = vld [vmem:[#allocation8 + $0x58] sm:$0xff]
    %v206 = vld [vmem:[#allocation8 + $0x60] sm:$0xff]
    %v207 = vld [vmem:[#allocation8 + $0x68] sm:$0xff]
    %v208 = vld [vmem:[#allocation8 + $0x70] sm:$0xff]
    %v209 = vld [vmem:[#allocation8 + $0x78] sm:$0xff]
    %v210 = vld [vmem:[%s4] sm:$0x1]
    %v212 = vlaneseq
    %v213 = vshrl.u32 %v212, 7
    %v214 = vsub.s32 0, %v213
    %v215 = vrot.slane %v210, %v214
    %217 = vmatprep.subr.mxu0 0.0
    %218 = vmatpush1.msra.mxu0 %v194
    %219 = vmatprep.subr.mxu0 0.0
    %220 = vmatpush1.msra.mxu0 %v195
    %221 = vmatprep.subr.mxu0 0.0
    %222 = vmatpush1.msra.mxu0 %v196
    %223 = vmatprep.subr.mxu0 0.0
    %224 = vmatpush1.msra.mxu0 %v197
    %225 = vmatprep.subr.mxu0 0.0
    %226 = vmatpush1.msra.mxu0 %v198
    %227 = vmatprep.subr.mxu0 0.0
    %228 = vmatpush1.msra.mxu0 %v199
    %229 = vmatprep.subr.mxu0 0.0
    %230 = vmatpush1.msra.mxu0 %v200
    %231 = vmatprep.subr.mxu0 0.0
    %232 = vmatpush1.msra.mxu0 %v201
    %233 = vmatprep.subr.mxu0 0.0
    %234 = vmatpush1.msra.mxu0 %v202
    %235 = vmatprep.subr.mxu0 0.0
    %236 = vmatpush1.msra.mxu0 %v203
    %237 = vmatprep.subr.mxu0 0.0
    %238 = vmatpush1.msra.mxu0 %v204
    %239 = vmatprep.subr.mxu0 0.0
    %240 = vmatpush1.msra.mxu0 %v205
    %241 = vmatprep.subr.mxu0 0.0
    %242 = vmatpush1.msra.mxu0 %v206
    %243 = vmatprep.subr.mxu0 0.0
    %244 = vmatpush1.msra.mxu0 %v207
    %245 = vmatprep.subr.mxu0 0.0
    %246 = vmatpush1.msra.mxu0 %v208
    %247 = vmatprep.subr.mxu0 0.0
    %248 = vmatpush1.msra.mxu0 %v209
    %249 = vmatprep.subr.mxu0 0.0
    %250 = vmatpush1.msra.mxu0 0.0
    %251 = vmatprep.subr.mxu0 0.0
    %252 = vmatpush1.msra.mxu0 0.0
    %253 = vmatprep.subr.mxu0 0.0
    %254 = vmatpush1.msra.mxu0 0.0
    %255 = vmatprep.subr.mxu0 0.0
    %256 = vmatpush1.msra.mxu0 0.0
    %257 = vmatprep.subr.mxu0 0.0
    %258 = vmatpush1.msra.mxu0 0.0
    %259 = vmatprep.subr.mxu0 0.0
    %260 = vmatpush1.msra.mxu0 0.0
    %261 = vmatprep.subr.mxu0 0.0
    %262 = vmatpush1.msra.mxu0 0.0
    %263 = vmatprep.subr.mxu0 0.0
    %264 = vmatpush1.msra.mxu0 0.0
    %265 = vmatprep.subr.mxu0 0.0
    %266 = vmatpush1.msra.mxu0 0.0
    %267 = vmatprep.subr.mxu0 0.0
    %268 = vmatpush1.msra.mxu0 0.0
    %269 = vmatprep.subr.mxu0 0.0
    %270 = vmatpush1.msra.mxu0 0.0
    %271 = vmatprep.subr.mxu0 0.0
    %272 = vmatpush1.msra.mxu0 0.0
    %273 = vmatprep.subr.mxu0 0.0
    %274 = vmatpush1.msra.mxu0 0.0
    %275 = vmatprep.subr.mxu0 0.0
    %276 = vmatpush1.msra.mxu0 0.0
    %277 = vmatprep.subr.mxu0 0.0
    %278 = vmatpush1.msra.mxu0 0.0
    %279 = vmatprep.subr.mxu0 0.0
    %280 = vmatpush1.msra.mxu0 0.0
    %281 = vmatprep.mubr.f32.mxu0 0.0
    %282 = vmatmul.mubr.f32.gmra.mrb[0].mxu0 %v193
    %v283 = vpop.f32.mrb[0].mxu0
    %v284 = vadd.f32 %v215, %v283
    %v285 = vpop.f32.mrb[0].mxu0
    %286 = vdwg.mxu0
    %v287 = vmax.f32 %v284, 0.0
    %v288 = vld [vmem:[#allocation9] sm:$0xff]
    %v289 = vld [vmem:[#allocation9 + $0x8] sm:$0xff]
    %v290 = vld [vmem:[#allocation9 + $0x10] sm:$0xff]
    %v291 = vld [vmem:[#allocation9 + $0x18] sm:$0xff]
    %v292 = vld [vmem:[#allocation9 + $0x20] sm:$0xff]
    %v293 = vld [vmem:[#allocation9 + $0x28] sm:$0xff]
    %v294 = vld [vmem:[#allocation9 + $0x30] sm:$0xff]
    %v295 = vld [vmem:[#allocation9 + $0x38] sm:$0xff]
    %v296 = vld [vmem:[#allocation9 + $0x40] sm:$0xff]
    %v297 = vld [vmem:[#allocation9 + $0x48] sm:$0xff]
    %v298 = vld [vmem:[#allocation9 + $0x50] sm:$0xff]
    %v299 = vld [vmem:[#allocation9 + $0x58] sm:$0xff]
    %v300 = vld [vmem:[#allocation9 + $0x60] sm:$0xff]
    %v301 = vld [vmem:[#allocation9 + $0x68] sm:$0xff]
    %v302 = vld [vmem:[#allocation9 + $0x70] sm:$0xff]
    %v303 = vld [vmem:[#allocation9 + $0x78] sm:$0xff]
    %v304 = vld [vmem:[%s6] sm:$0x1]
    %v306 = vlaneseq
    %v307 = vshrl.u32 %v306, 7
    %v308 = vsub.s32 0, %v307
    %v309 = vrot.slane %v304, %v308
    %311 = vmatprep.subr.mxu0 0.0
    %312 = vmatpush1.msra.mxu0 %v288
    %313 = vmatprep.subr.mxu0 0.0
    %314 = vmatpush1.msra.mxu0 %v289
    %315 = vmatprep.subr.mxu0 0.0
    %316 = vmatpush1.msra.mxu0 %v290
    %317 = vmatprep.subr.mxu0 0.0
    %318 = vmatpush1.msra.mxu0 %v291
    %319 = vmatprep.subr.mxu0 0.0
    %320 = vmatpush1.msra.mxu0 %v292
    %321 = vmatprep.subr.mxu0 0.0
    %322 = vmatpush1.msra.mxu0 %v293
    %323 = vmatprep.subr.mxu0 0.0
    %324 = vmatpush1.msra.mxu0 %v294
    %325 = vmatprep.subr.mxu0 0.0
    %326 = vmatpush1.msra.mxu0 %v295
    %327 = vmatprep.subr.mxu0 0.0
    %328 = vmatpush1.msra.mxu0 %v296
    %329 = vmatprep.subr.mxu0 0.0
    %330 = vmatpush1.msra.mxu0 %v297
    %331 = vmatprep.subr.mxu0 0.0
    %332 = vmatpush1.msra.mxu0 %v298
    %333 = vmatprep.subr.mxu0 0.0
    %334 = vmatpush1.msra.mxu0 %v299
    %335 = vmatprep.subr.mxu0 0.0
    %336 = vmatpush1.msra.mxu0 %v300
    %337 = vmatprep.subr.mxu0 0.0
    %338 = vmatpush1.msra.mxu0 %v301
    %339 = vmatprep.subr.mxu0 0.0
    %340 = vmatpush1.msra.mxu0 %v302
    %341 = vmatprep.subr.mxu0 0.0
    %342 = vmatpush1.msra.mxu0 %v303
    %343 = vmatprep.subr.mxu0 0.0
    %344 = vmatpush1.msra.mxu0 0.0
    %345 = vmatprep.subr.mxu0 0.0
    %346 = vmatpush1.msra.mxu0 0.0
    %347 = vmatprep.subr.mxu0 0.0
    %348 = vmatpush1.msra.mxu0 0.0
    %349 = vmatprep.subr.mxu0 0.0
    %350 = vmatpush1.msra.mxu0 0.0
    %351 = vmatprep.subr.mxu0 0.0
    %352 = vmatpush1.msra.mxu0 0.0
    %353 = vmatprep.subr.mxu0 0.0
    %354 = vmatpush1.msra.mxu0 0.0
    %355 = vmatprep.subr.mxu0 0.0
    %356 = vmatpush1.msra.mxu0 0.0
    %357 = vmatprep.subr.mxu0 0.0
    %358 = vmatpush1.msra.mxu0 0.0
    %359 = vmatprep.subr.mxu0 0.0
    %360 = vmatpush1.msra.mxu0 0.0
    %361 = vmatprep.subr.mxu0 0.0
    %362 = vmatpush1.msra.mxu0 0.0
    %363 = vmatprep.subr.mxu0 0.0
    %364 = vmatpush1.msra.mxu0 0.0
    %365 = vmatprep.subr.mxu0 0.0
    %366 = vmatpush1.msra.mxu0 0.0
    %367 = vmatprep.subr.mxu0 0.0
    %368 = vmatpush1.msra.mxu0 0.0
    %369 = vmatprep.subr.mxu0 0.0
    %370 = vmatpush1.msra.mxu0 0.0
    %371 = vmatprep.subr.mxu0 0.0
    %372 = vmatpush1.msra.mxu0 0.0
    %373 = vmatprep.subr.mxu0 0.0
    %374 = vmatpush1.msra.mxu0 0.0
    %375 = vmatprep.mubr.f32.mxu0 0.0
    %376 = vmatmul.mubr.f32.gmra.mrb[0].mxu0 %v287
    %v377 = vpop.f32.mrb[0].mxu0
    %v378 = vadd.f32 %v309, %v377
    %v379 = vpop.f32.mrb[0].mxu0
    %380 = vdwg.mxu0
    %v381 = vmax.f32 %v378, 0.0
    %v382 = vld [vmem:[#allocation11] sm:$0xff]
    %v383 = vld [vmem:[#allocation11 + $0x8] sm:$0xff]
    %v384 = vld [vmem:[#allocation11 + $0x10] sm:$0xff]
    %v385 = vld [vmem:[#allocation11 + $0x18] sm:$0xff]
    %v386 = vld [vmem:[#allocation11 + $0x20] sm:$0xff]
    %v387 = vld [vmem:[#allocation11 + $0x28] sm:$0xff]
    %v388 = vld [vmem:[#allocation11 + $0x30] sm:$0xff]
    %v389 = vld [vmem:[#allocation11 + $0x38] sm:$0xff]
    %v390 = vld [vmem:[#allocation11 + $0x40] sm:$0xff]
    %v391 = vld [vmem:[#allocation11 + $0x48] sm:$0xff]
    %v392 = vld [vmem:[#allocation11 + $0x50] sm:$0xff]
    %v393 = vld [vmem:[#allocation11 + $0x58] sm:$0xff]
    %v394 = vld [vmem:[#allocation11 + $0x60] sm:$0xff]
    %v395 = vld [vmem:[#allocation11 + $0x68] sm:$0xff]
    %v396 = vld [vmem:[#allocation11 + $0x70] sm:$0xff]
    %v397 = vld [vmem:[#allocation11 + $0x78] sm:$0xff]
    %v398 = vld [vmem:[%s8] sm:$0x1]
    %v400 = vlaneseq
    %v401 = vshrl.u32 %v400, 7
    %v402 = vsub.s32 0, %v401
    %v403 = vrot.slane %v398, %v402
    %405 = vmatprep.subr.mxu0 0.0
    %406 = vmatpush1.msra.mxu0 %v382
    %407 = vmatprep.subr.mxu0 0.0
    %408 = vmatpush1.msra.mxu0 %v383
    %409 = vmatprep.subr.mxu0 0.0
    %410 = vmatpush1.msra.mxu0 %v384
    %411 = vmatprep.subr.mxu0 0.0
    %412 = vmatpush1.msra.mxu0 %v385
    %413 = vmatprep.subr.mxu0 0.0
    %414 = vmatpush1.msra.mxu0 %v386
    %415 = vmatprep.subr.mxu0 0.0
    %416 = vmatpush1.msra.mxu0 %v387
    %417 = vmatprep.subr.mxu0 0.0
    %418 = vmatpush1.msra.mxu0 %v388
    %419 = vmatprep.subr.mxu0 0.0
    %420 = vmatpush1.msra.mxu0 %v389
    %421 = vmatprep.subr.mxu0 0.0
    %422 = vmatpush1.msra.mxu0 %v390
    %423 = vmatprep.subr.mxu0 0.0
    %424 = vmatpush1.msra.mxu0 %v391
    %425 = vmatprep.subr.mxu0 0.0
    %426 = vmatpush1.msra.mxu0 %v392
    %427 = vmatprep.subr.mxu0 0.0
    %428 = vmatpush1.msra.mxu0 %v393
    %429 = vmatprep.subr.mxu0 0.0
    %430 = vmatpush1.msra.mxu0 %v394
    %431 = vmatprep.subr.mxu0 0.0
    %432 = vmatpush1.msra.mxu0 %v395
    %433 = vmatprep.subr.mxu0 0.0
    %434 = vmatpush1.msra.mxu0 %v396
    %435 = vmatprep.subr.mxu0 0.0
    %436 = vmatpush1.msra.mxu0 %v397
    %437 = vmatprep.subr.mxu0 0.0
    %438 = vmatpush1.msra.mxu0 0.0
    %439 = vmatprep.subr.mxu0 0.0
    %440 = vmatpush1.msra.mxu0 0.0
    %441 = vmatprep.subr.mxu0 0.0
    %442 = vmatpush1.msra.mxu0 0.0
    %443 = vmatprep.subr.mxu0 0.0
    %444 = vmatpush1.msra.mxu0 0.0
    %445 = vmatprep.subr.mxu0 0.0
    %446 = vmatpush1.msra.mxu0 0.0
    %447 = vmatprep.subr.mxu0 0.0
    %448 = vmatpush1.msra.mxu0 0.0
    %449 = vmatprep.subr.mxu0 0.0
    %450 = vmatpush1.msra.mxu0 0.0
    %451 = vmatprep.subr.mxu0 0.0
    %452 = vmatpush1.msra.mxu0 0.0
    %453 = vmatprep.subr.mxu0 0.0
    %454 = vmatpush1.msra.mxu0 0.0
    %455 = vmatprep.subr.mxu0 0.0
    %456 = vmatpush1.msra.mxu0 0.0
    %457 = vmatprep.subr.mxu0 0.0
    %458 = vmatpush1.msra.mxu0 0.0
    %459 = vmatprep.subr.mxu0 0.0
    %460 = vmatpush1.msra.mxu0 0.0
    %461 = vmatprep.subr.mxu0 0.0
    %462 = vmatpush1.msra.mxu0 0.0
    %463 = vmatprep.subr.mxu0 0.0
    %464 = vmatpush1.msra.mxu0 0.0
    %465 = vmatprep.subr.mxu0 0.0
    %466 = vmatpush1.msra.mxu0 0.0
    %467 = vmatprep.subr.mxu0 0.0
    %468 = vmatpush1.msra.mxu0 0.0
    %469 = vmatprep.mubr.f32.mxu0 0.0
    %470 = vmatmul.mubr.f32.gmra.mrb[0].mxu0 %v381
    %v471 = vpop.f32.mrb[0].mxu0
    %v472 = vadd.f32 %v403, %v471
    %v473 = vpop.f32.mrb[0].mxu0
    %474 = vdwg.mxu0
    %v475 = vmax.f32 %v472, 0.0
    %v476 = vld [vmem:[%s9] sm:$0x1]
    %v477 = vld [vmem:[#allocation2] sm:$0x1]
    %479 = vset.pattern.permute.xlu0 0
    %480 = vperm.xlu0 %479, %v477
    %v481 = vpop.permute.xlu0 %480
    %v483 = vlaneseq
    %v484 = vshrl.u32 %v483, 7
    %v485 = vsub.s32 0, %v484
    %v486 = vrot.slane %v481, %v485
    %487 = vmatprep.subr.mxu0 0.0
    %488 = vmatpush1.xpose.msra.mxu0 %v475
    %489 = vmatprep.subr.mxu0 0.0
    %490 = vmatpush1.xpose.msra.mxu0 0.0
    %491 = vmatprep.subr.mxu0 0.0
    %492 = vmatpush1.xpose.msra.mxu0 0.0
    %493 = vmatprep.subr.mxu0 0.0
    %494 = vmatpush1.xpose.msra.mxu0 0.0
    %495 = vmatprep.subr.mxu0 0.0
    %496 = vmatpush1.xpose.msra.mxu0 0.0
    %497 = vmatprep.subr.mxu0 0.0
    %498 = vmatpush1.xpose.msra.mxu0 0.0
    %499 = vmatprep.subr.mxu0 0.0
    %500 = vmatpush1.xpose.msra.mxu0 0.0
    %501 = vmatprep.subr.mxu0 0.0
    %502 = vmatpush1.xpose.msra.mxu0 0.0
    %503 = vmatprep.subr.mxu0 0.0
    %504 = vmatpush1.xpose.msra.mxu0 0.0
    %505 = vmatprep.subr.mxu0 0.0
    %506 = vmatpush1.xpose.msra.mxu0 0.0
    %507 = vmatprep.subr.mxu0 0.0
    %508 = vmatpush1.xpose.msra.mxu0 0.0
    %509 = vmatprep.subr.mxu0 0.0
    %510 = vmatpush1.xpose.msra.mxu0 0.0
    %511 = vmatprep.subr.mxu0 0.0
    %512 = vmatpush1.xpose.msra.mxu0 0.0
    %513 = vmatprep.subr.mxu0 0.0
    %514 = vmatpush1.xpose.msra.mxu0 0.0
    %515 = vmatprep.subr.mxu0 0.0
    %516 = vmatpush1.xpose.msra.mxu0 0.0
    %517 = vmatprep.subr.mxu0 0.0
    %518 = vmatpush1.xpose.msra.mxu0 0.0
    %519 = vmatprep.subr.mxu0 0.0
    %520 = vmatpush1.xpose.msra.mxu0 0.0
    %521 = vmatprep.subr.mxu0 0.0
    %522 = vmatpush1.xpose.msra.mxu0 0.0
    %523 = vmatprep.subr.mxu0 0.0
    %524 = vmatpush1.xpose.msra.mxu0 0.0
    %525 = vmatprep.subr.mxu0 0.0
    %526 = vmatpush1.xpose.msra.mxu0 0.0
    %527 = vmatprep.subr.mxu0 0.0
    %528 = vmatpush1.xpose.msra.mxu0 0.0
    %529 = vmatprep.subr.mxu0 0.0
    %530 = vmatpush1.xpose.msra.mxu0 0.0
    %531 = vmatprep.subr.mxu0 0.0
    %532 = vmatpush1.xpose.msra.mxu0 0.0
    %533 = vmatprep.subr.mxu0 0.0
    %534 = vmatpush1.xpose.msra.mxu0 0.0
    %535 = vmatprep.subr.mxu0 0.0
    %536 = vmatpush1.xpose.msra.mxu0 0.0
    %537 = vmatprep.subr.mxu0 0.0
    %538 = vmatpush1.xpose.msra.mxu0 0.0
    %539 = vmatprep.subr.mxu0 0.0
    %540 = vmatpush1.xpose.msra.mxu0 0.0
    %541 = vmatprep.subr.mxu0 0.0
    %542 = vmatpush1.xpose.msra.mxu0 0.0
    %543 = vmatprep.subr.mxu0 0.0
    %544 = vmatpush1.xpose.msra.mxu0 0.0
    %545 = vmatprep.subr.mxu0 0.0
    %546 = vmatpush1.xpose.msra.mxu0 0.0
    %547 = vmatprep.subr.mxu0 0.0
    %548 = vmatpush1.xpose.msra.mxu0 0.0
    %549 = vmatprep.subr.mxu0 0.0
    %550 = vmatpush1.xpose.msra.mxu0 0.0
    %551 = vmatprep.mubr.f32.mxu0 0.0
    %552 = vmatmul.mubr.f32.gmra.mrb[0].mxu0 %v476
    %v553 = vpop.f32.mrb[0].mxu0
    %v554 = vadd.f32 %v486, %v553
    %v555 = vpop.f32.mrb[0].mxu0
    %556 = vdwg.mxu0
    %v557 = vsub.f32 0.0, %v554
    %v558 = vmul.f32 %v557, 1.442695
    %v559 = vpow.pop %v558
    %v560 = vadd.f32 %v559, 1.0
    %v561 = vrcp.pop %v560
    %vm562 = vcmask 57344
    %563 = vst.msk [vmem:[#allocation12] sm:$0x1] %vm562, %v561
    // Predicated region
    $region66: #{tpu_custom_call.1} parent=1 // pred_check
      _
    $region67: #{tpu_custom_call.1} parent=1 // pred_check_branch
      %565 = sbr.rel (0) target = $region69
    $region68: #{tpu_custom_call.1} parent=1 // pred_region
      %s567 = ssub.s32 16, 16
      %568 = vsyncadd [#allocation5], %s567
      %s570 = sshll.u32 [#allocation12], 4
      %s571 = int_to_ptr.vmem [resolvable:$true] %s570
      %573 = dma.vmem_to_hbm [thread:$0]  %s571, 16, %s11, [#allocation5]
    $region69: #{tpu_custom_call.1} parent=1 // pred_fallthru
      _
    // Predicated region
    $region70: #{tpu_custom_call.1} parent=1 // pred_check
      _
    $region71: #{tpu_custom_call.1} parent=1 // pred_check_branch
      %575 = sbr.rel (0) target = $region73
    $region72: #{tpu_custom_call.1} parent=1 // pred_region
      %576 = dma.done [#allocation5], 16
    $region73: #{tpu_custom_call.1} parent=1 // pred_fallthru
      _
    %577 = vsyncpa [#allocation4], 1
    %578 = vsyncpa [#allocation7], 1
    %579 = vsyncpa [#allocation10], 1
    %580 = vsyncpa [#allocation5], 1

</llo_original>
